<compile_context>
chip_gen: v6e
topology: v6e:2x2x1
jax: 0.10.0
libtpu: 0.0.40
codegen_flags: <defaults>
</compile_context>

<pallas_src>
import jax
import jax.numpy as jnp
from jax.experimental import pallas as pl
from jax.experimental.pallas import tpu as pltpu

LANE = 128
SUBLANE = 8


def _round_up(x, m):
    return (x + m - 1) // m * m


def _leaky_relu(x, slope):
    return jnp.where(x > 0, x, slope * x)


# ---------------------------------------------------------------------------
# Kernel bodies
# ---------------------------------------------------------------------------

def _head_compute(x, w1, b1, w2, b2, w3, b3):
    """One 3-layer MLP head on already-loaded VMEM tiles. x is bf16 [bm, K]."""
    h1 = jnp.dot(x, w1, preferred_element_type=jnp.float32) + b1
    h1 = _leaky_relu(h1, 0.2)
    h2 = jnp.dot(h1.astype(w2.dtype), w2, preferred_element_type=jnp.float32) + b2
    h2 = _leaky_relu(h2, 0.2)
    q = jnp.dot(h2.astype(w3.dtype), w3, preferred_element_type=jnp.float32) + b3
    return _leaky_relu(q, 0.01)


def _single_q_kernel(x_ref, w1_ref, b1_ref, w2_ref, b2_ref, w3_ref, b3_ref,
                     out_ref):
    out_ref[...] = _head_compute(
        x_ref[...],
        w1_ref[...], b1_ref[...],
        w2_ref[...], b2_ref[...],
        w3_ref[...], b3_ref[...],
    )


def _twin_q_kernel(x_ref,
                   w1a_ref, b1a_ref, w2a_ref, b2a_ref, w3a_ref, b3a_ref,
                   w1b_ref, b1b_ref, w2b_ref, b2b_ref, w3b_ref, b3b_ref,
                   q1_ref, q2_ref):
    x = x_ref[...]
    q1_ref[...] = _head_compute(x, w1a_ref[...], b1a_ref[...], w2a_ref[...],
                                b2a_ref[...], w3a_ref[...], b3a_ref[...])
    q2_ref[...] = _head_compute(x, w1b_ref[...], b1b_ref[...], w2b_ref[...],
                                b2b_ref[...], w3b_ref[...], b3b_ref[...])


# ---------------------------------------------------------------------------
# Parameter preparation (done once, outside the hot path)
# ---------------------------------------------------------------------------

def init_params(key, in_dim, hidden_units=(256, 256), out_dim=1, init_output=0.0):
    """Deterministic synthetic init (stand-in for initialize_weight / orthogonal).

    Weights are stored [in_features, out_features] (transposed vs. torch
    nn.Linear.weight) so the forward pass is x @ W + b.
    """
    # TODO(synk): orthogonal `initialize_weight` init not reproduced; forward semantics unaffected.
    dims = (in_dim,) + tuple(hidden_units) + (out_dim,)
    keys = jax.random.split(key, len(dims) - 1)
    params = []
    for i, k in enumerate(keys):
        fan_in, fan_out = dims[i], dims[i + 1]
        w = jax.random.normal(k, (fan_in, fan_out), jnp.float32) / jnp.sqrt(float(fan_in))
        b = jnp.zeros((1, fan_out), jnp.float32)
        params.extend([w, b])
    params[-1] = jnp.full((1, out_dim), init_output, jnp.float32)  # last bias <- init_output
    return tuple(params)


def prepare_params(params, compute_dtype=jnp.bfloat16):
    """Pad/cast raw f32 params into kernel-friendly layout.

    - W1: pad contraction dim (z+action) up to a multiple of 128, cast bf16.
    - W2: cast bf16.
    - W3 [256,1] -> zero-padded [256,128] bf16 (lane-dense output); b3 -> [1,128].
    - Biases stay f32.
    """
    w1, b1, w2, b2, w3, b3 = params
    d_in, hidden = w1.shape
    out_dim = w3.shape[1]
    k_pad = _round_up(d_in, LANE)

    w1p = jnp.zeros((k_pad, hidden), compute_dtype).at[:d_in, :].set(w1.astype(compute_dtype))
    w2p = w2.astype(compute_dtype)
    w3p = jnp.zeros((w3.shape[0], LANE), compute_dtype).at[:, :out_dim].set(w3.astype(compute_dtype))
    b3p = jnp.zeros((1, LANE), jnp.float32).at[:, :out_dim].set(b3.astype(jnp.float32))

    return (w1p, b1.astype(jnp.float32), w2p, b2.astype(jnp.float32), w3p, b3p)


# ---------------------------------------------------------------------------
# Wrappers
# ---------------------------------------------------------------------------

def _pack_inputs(z, action, k_pad, compute_dtype=jnp.bfloat16):
    """torch.cat([z, action], dim=1), zero-pad to [B_pad, k_pad], cast bf16."""
    x = jnp.concatenate([z, action], axis=1)
    b, d = x.shape
    if b >= LANE:
        block_b = LANE
    else:
        block_b = _round_up(b, SUBLANE)
    b_pad = _round_up(b, block_b)
    xp = jnp.zeros((b_pad, k_pad), compute_dtype).at[:b, :d].set(x.astype(compute_dtype))
    return xp, block_b


def _weight_specs(k_pad, hidden, out_lanes):
    const = lambda shape: pl.BlockSpec(shape, lambda i: (0, 0))  # VMEM-resident across grid
    return [
        const((k_pad, hidden)), const((1, hidden)),
        const((hidden, hidden)), const((1, hidden)),
        const((hidden, out_lanes)), const((1, out_lanes)),
    ]


def single_q_forward(z, action, prepared):
    """z: [B, z1+z2], action: [B, act] -> q: [B, 1] (f32)."""
    w1, b1, w2, b2, w3, b3 = prepared
    k_pad, hidden = w1.shape
    out_lanes = w3.shape[1]
    b = z.shape[0]

    xp, block_b = _pack_inputs(z, action, k_pad, compute_dtype=w1.dtype)
    b_pad = xp.shape[0]
    grid = (b_pad // block_b,)

    out = pl.pallas_call(
        _single_q_kernel,
        out_shape=jax.ShapeDtypeStruct((b_pad, out_lanes), jnp.float32),
        grid=grid,
        in_specs=[pl.BlockSpec((block_b, k_pad), lambda i: (i, 0))]
                 + _weight_specs(k_pad, hidden, out_lanes),
        out_specs=pl.BlockSpec((block_b, out_lanes), lambda i: (i, 0)),
        compiler_params=pltpu.CompilerParams(dimension_semantics=("parallel",)),
    )(xp, w1, b1, w2, b2, w3, b3)

    return out[:b, 0:1]


def twinned_q_forward(z, action, prepared_a, prepared_b):
    """Fused twin Q-heads (TwinnedQNetwork use case): one pallas_call, shared x."""
    w1a, _, _, _, w3a, _ = prepared_a
    k_pad, hidden = w1a.shape
    out_lanes = w3a.shape[1]
    b = z.shape[0]

    xp, block_b = _pack_inputs(z, action, k_pad, compute_dtype=w1a.dtype)
    b_pad = xp.shape[0]
    grid = (b_pad // block_b,)

    out_spec = pl.BlockSpec((block_b, out_lanes), lambda i: (i, 0))
    q1, q2 = pl.pallas_call(
        _twin_q_kernel,
        out_shape=(jax.ShapeDtypeStruct((b_pad, out_lanes), jnp.float32),
                   jax.ShapeDtypeStruct((b_pad, out_lanes), jnp.float32)),
        grid=grid,
        in_specs=[pl.BlockSpec((block_b, k_pad), lambda i: (i, 0))]
                 + _weight_specs(k_pad, hidden, out_lanes)
                 + _weight_specs(k_pad, hidden, out_lanes),
        out_specs=(out_spec, out_spec),
        compiler_params=pltpu.CompilerParams(dimension_semantics=("parallel",)),
    )(xp, *prepared_a, *prepared_b)

    return q1[:b, 0:1], q2[:b, 0:1]


# ---------------------------------------------------------------------------
# Reference (mirrors the kernel numerics: bf16 operands, f32 accumulation)
# ---------------------------------------------------------------------------

def reference_forward(z, action, params, compute_dtype=jnp.bfloat16):
    w1, b1, w2, b2, w3, b3 = params
    cd = compute_dtype
    x = jnp.concatenate([z, action], axis=1)
    h1 = _leaky_relu(jnp.dot(x.astype(cd), w1.astype(cd),
                             preferred_element_type=jnp.float32) + b1, 0.2)
    h2 = _leaky_relu(jnp.dot(h1.astype(cd), w2.astype(cd),
                             preferred_element_type=jnp.float32) + b2, 0.2)
    return _leaky_relu(jnp.dot(h2.astype(cd), w3.astype(cd),
                               preferred_element_type=jnp.float32) + b3, 0.01)


if __name__ == "__main__":
    # Module-consistent small shapes: action_shape=(6,), z1_dim=32, z2_dim=64.
    B, act_dim, z1_dim, z2_dim = 8, 6, 32, 64
    hidden_units = (256, 256)
    in_dim = act_dim + z1_dim + z2_dim  # 102 -> padded to 128 in prepare/pack

    key = jax.random.PRNGKey(0)
    k_z, k_a, k_p1, k_p2 = jax.random.split(key, 4)

    z = jax.random.normal(k_z, (B, z1_dim + z2_dim), jnp.float32)
    action = jax.random.normal(k_a, (B, act_dim), jnp.float32)

    params_a = init_params(k_p1, in_dim, hidden_units, out_dim=1, init_output=0.0)
    params_b = init_params(k_p2, in_dim, hidden_units, out_dim=1, init_output=0.0)
    prep_a = prepare_params(params_a)
    prep_b = prepare_params(params_b)

    # Single head (matches SingleQNetwork.forward).
    q = jax.block_until_ready(single_q_forward(z, action, prep_a))
    q_ref = reference_forward(z, action, params_a)
    assert q.shape == (B, 1)
    assert jnp.allclose(q, q_ref, atol=5e-3, rtol=5e-3)

    # Fused twin heads (TwinnedQNetwork usage; each head == SingleQNetwork).
    q1, q2 = twinned_q_forward(z, action, prep_a, prep_b)
    q1 = jax.block_until_ready(q1)
    q2 = jax.block_until_ready(q2)
    q1_ref = reference_forward(z, action, params_a)
    q2_ref = reference_forward(z, action, params_b)
    assert q1.shape == (B, 1) and q2.shape == (B, 1)
    assert jnp.allclose(q1, q1_ref, atol=5e-3, rtol=5e-3)
    assert jnp.allclose(q2, q2_ref, atol=5e-3, rtol=5e-3)

    print("KERNEL_OK")
</pallas_src>

<mosaic_0001>
module attributes {stable_mosaic.version = 11 : i64} {
  func.func @_single_q_kernel(%arg0: i32, %arg1: memref<8x128xbf16, #tpu.memory_space<vmem>>, %arg2: memref<128x256xbf16, #tpu.memory_space<vmem>>, %arg3: memref<1x256xf32, #tpu.memory_space<vmem>>, %arg4: memref<256x256xbf16, #tpu.memory_space<vmem>>, %arg5: memref<1x256xf32, #tpu.memory_space<vmem>>, %arg6: memref<256x128xbf16, #tpu.memory_space<vmem>>, %arg7: memref<1x128xf32, #tpu.memory_space<vmem>>, %arg8: memref<8x128xf32, #tpu.memory_space<vmem>>) attributes {dimension_semantics = [#tpu.dimension_semantics<parallel>], iteration_bounds = array<i64: 1>, scalar_prefetch = 0 : i64, scratch_operands = 0 : i64, tpu.core_type = #tpu.core_type<tc>, window_params = [{transform_indices = @transform_0, window_bounds = array<i64: 8, 128>}, {pipeline_mode = #tpu.pipeline_mode<synchronous>, transform_indices = @transform_1, window_bounds = array<i64: 128, 256>}, {pipeline_mode = #tpu.pipeline_mode<synchronous>, transform_indices = @transform_2, window_bounds = array<i64: 1, 256>}, {pipeline_mode = #tpu.pipeline_mode<synchronous>, transform_indices = @transform_3, window_bounds = array<i64: 256, 256>}, {pipeline_mode = #tpu.pipeline_mode<synchronous>, transform_indices = @transform_4, window_bounds = array<i64: 1, 256>}, {pipeline_mode = #tpu.pipeline_mode<synchronous>, transform_indices = @transform_5, window_bounds = array<i64: 256, 128>}, {pipeline_mode = #tpu.pipeline_mode<synchronous>, transform_indices = @transform_6, window_bounds = array<i64: 1, 128>}, {transform_indices = @transform_7, window_bounds = array<i64: 8, 128>}]} {
    %c0 = arith.constant 0 : index
    %c0_0 = arith.constant 0 : index
    %0 = vector.load %arg1[%c0, %c0_0] : memref<8x128xbf16, #tpu.memory_space<vmem>>, vector<8x128xbf16>
    %c0_1 = arith.constant 0 : index
    %c0_2 = arith.constant 0 : index
    %1 = vector.load %arg2[%c0_1, %c0_2] : memref<128x256xbf16, #tpu.memory_space<vmem>>, vector<128x256xbf16>
    %c0_3 = arith.constant 0 : index
    %c0_4 = arith.constant 0 : index
    %2 = vector.load %arg3[%c0_3, %c0_4] : memref<1x256xf32, #tpu.memory_space<vmem>>, vector<1x256xf32>
    %c0_5 = arith.constant 0 : index
    %c0_6 = arith.constant 0 : index
    %3 = vector.load %arg4[%c0_5, %c0_6] : memref<256x256xbf16, #tpu.memory_space<vmem>>, vector<256x256xbf16>
    %c0_7 = arith.constant 0 : index
    %c0_8 = arith.constant 0 : index
    %4 = vector.load %arg5[%c0_7, %c0_8] : memref<1x256xf32, #tpu.memory_space<vmem>>, vector<1x256xf32>
    %c0_9 = arith.constant 0 : index
    %c0_10 = arith.constant 0 : index
    %5 = vector.load %arg6[%c0_9, %c0_10] : memref<256x128xbf16, #tpu.memory_space<vmem>>, vector<256x128xbf16>
    %c0_11 = arith.constant 0 : index
    %c0_12 = arith.constant 0 : index
    %6 = vector.load %arg7[%c0_11, %c0_12] : memref<1x128xf32, #tpu.memory_space<vmem>>, vector<1x128xf32>
    %cst = arith.constant dense<0.000000e+00> : vector<8x256xf32>
    %7 = tpu.matmul %0, %1, %cst {dimension_numbers = #tpu.dot_dimension_numbers<[1], [0], [0], [1], [0, 0, 1, 1], [], []>} : vector<8x128xbf16>, vector<128x256xbf16>, vector<8x256xf32> -> vector<8x256xf32>
    %8 = vector.broadcast %2 : vector<1x256xf32> to vector<8x256xf32>
    %9 = arith.addf %7, %8 : vector<8x256xf32>
    %cst_13 = arith.constant 0.000000e+00 : f32
    %10 = vector.broadcast %cst_13 : f32 to vector<8x256xf32>
    %11 = arith.cmpf ogt, %9, %10 : vector<8x256xf32>
    %cst_14 = arith.constant 2.000000e-01 : f32
    %12 = vector.broadcast %cst_14 : f32 to vector<8x256xf32>
    %13 = arith.mulf %12, %9 : vector<8x256xf32>
    %14 = arith.select %11, %9, %13 : vector<8x256xi1>, vector<8x256xf32>
    %15 = arith.truncf %14 : vector<8x256xf32> to vector<8x256xbf16>
    %cst_15 = arith.constant dense<0.000000e+00> : vector<8x256xf32>
    %16 = tpu.matmul %15, %3, %cst_15 {dimension_numbers = #tpu.dot_dimension_numbers<[1], [0], [0], [1], [0, 0, 1, 1], [], []>} : vector<8x256xbf16>, vector<256x256xbf16>, vector<8x256xf32> -> vector<8x256xf32>
    %17 = vector.broadcast %4 : vector<1x256xf32> to vector<8x256xf32>
    %18 = arith.addf %16, %17 : vector<8x256xf32>
    %cst_16 = arith.constant 0.000000e+00 : f32
    %19 = vector.broadcast %cst_16 : f32 to vector<8x256xf32>
    %20 = arith.cmpf ogt, %18, %19 : vector<8x256xf32>
    %cst_17 = arith.constant 2.000000e-01 : f32
    %21 = vector.broadcast %cst_17 : f32 to vector<8x256xf32>
    %22 = arith.mulf %21, %18 : vector<8x256xf32>
    %23 = arith.select %20, %18, %22 : vector<8x256xi1>, vector<8x256xf32>
    %24 = arith.truncf %23 : vector<8x256xf32> to vector<8x256xbf16>
    %cst_18 = arith.constant dense<0.000000e+00> : vector<8x128xf32>
    %25 = tpu.matmul %24, %5, %cst_18 {dimension_numbers = #tpu.dot_dimension_numbers<[1], [0], [0], [1], [0, 0, 1, 1], [], []>} : vector<8x256xbf16>, vector<256x128xbf16>, vector<8x128xf32> -> vector<8x128xf32>
    %26 = vector.broadcast %6 : vector<1x128xf32> to vector<8x128xf32>
    %27 = arith.addf %25, %26 : vector<8x128xf32>
    %cst_19 = arith.constant 0.000000e+00 : f32
    %28 = vector.broadcast %cst_19 : f32 to vector<8x128xf32>
    %29 = arith.cmpf ogt, %27, %28 : vector<8x128xf32>
    %cst_20 = arith.constant 0.00999999977 : f32
    %30 = vector.broadcast %cst_20 : f32 to vector<8x128xf32>
    %31 = arith.mulf %30, %27 : vector<8x128xf32>
    %32 = arith.select %29, %27, %31 : vector<8x128xi1>, vector<8x128xf32>
    %c0_21 = arith.constant 0 : index
    %c0_22 = arith.constant 0 : index
    %33 = vector.load %arg8[%c0_21, %c0_22] : memref<8x128xf32, #tpu.memory_space<vmem>>, vector<8x128xf32>
    tpu.vector_store %arg8[%c0_21, %c0_22], %32 {strides = array<i32>} : memref<8x128xf32, #tpu.memory_space<vmem>>, vector<8x128xf32>,
    return
  }
  func.func @transform_0(%arg0: i32) -> (i32, i32) {
    %c0_i32 = arith.constant 0 : i32
    %c0_i32_0 = arith.constant 0 : i32
    return %arg0, %c0_i32 : i32, i32
  }
  func.func @transform_1(%arg0: i32) -> (i32, i32) {
    %c0_i32 = arith.constant 0 : i32
    %c0_i32_0 = arith.constant 0 : i32
    %c0_i32_1 = arith.constant 0 : i32
    return %c0_i32, %c0_i32_0 : i32, i32
  }
  func.func @transform_2(%arg0: i32) -> (i32, i32) {
    %c0_i32 = arith.constant 0 : i32
    %c0_i32_0 = arith.constant 0 : i32
    %c0_i32_1 = arith.constant 0 : i32
    return %c0_i32, %c0_i32_0 : i32, i32
  }
  func.func @transform_3(%arg0: i32) -> (i32, i32) {
    %c0_i32 = arith.constant 0 : i32
    %c0_i32_0 = arith.constant 0 : i32
    %c0_i32_1 = arith.constant 0 : i32
    return %c0_i32, %c0_i32_0 : i32, i32
  }
  func.func @transform_4(%arg0: i32) -> (i32, i32) {
    %c0_i32 = arith.constant 0 : i32
    %c0_i32_0 = arith.constant 0 : i32
    %c0_i32_1 = arith.constant 0 : i32
    return %c0_i32, %c0_i32_0 : i32, i32
  }
  func.func @transform_5(%arg0: i32) -> (i32, i32) {
    %c0_i32 = arith.constant 0 : i32
    %c0_i32_0 = arith.constant 0 : i32
    %c0_i32_1 = arith.constant 0 : i32
    return %c0_i32, %c0_i32_0 : i32, i32
  }
  func.func @transform_6(%arg0: i32) -> (i32, i32) {
    %c0_i32 = arith.constant 0 : i32
    %c0_i32_0 = arith.constant 0 : i32
    %c0_i32_1 = arith.constant 0 : i32
    return %c0_i32, %c0_i32_0 : i32, i32
  }
  func.func @transform_7(%arg0: i32) -> (i32, i32) {
    %c0_i32 = arith.constant 0 : i32
    %c0_i32_0 = arith.constant 0 : i32
    return %arg0, %c0_i32 : i32, i32
  }
}

</mosaic_0001>

<llo_original>
// kernel: tpu_custom_call.1
$region0: #{tpu_custom_call.1}
  #allocation0 [shape = 'u32[]', space=smem, size = 0x4, offset = 0x4, fixed_abs, tag = 'smem constant byte address 0x4 - core index']
  #allocation1 [shape = 'u32[144,128]{1,0:T(1,128)}', space=vmem, size = 0x12000, scoped, tag = 'internal scratch']
  %s0 = inlined_call_operand.hbm [shape: bf16[8,128], index: 0, kind: input, shape index: {}]
  %s1 = inlined_call_operand.hbm [shape: bf16[128,256], index: 1, kind: input, shape index: {}]
  %s2 = inlined_call_operand.vmem [shape: f32[1,256], index: 2, kind: input, shape index: {}]
  %s3 = inlined_call_operand.hbm [shape: bf16[256,256], index: 3, kind: input, shape index: {}]
  %s4 = inlined_call_operand.vmem [shape: f32[1,256], index: 4, kind: input, shape index: {}]
  %s5 = inlined_call_operand.hbm [shape: bf16[256,128], index: 5, kind: input, shape index: {}]
  %s6 = inlined_call_operand.vmem [shape: f32[1,128], index: 6, kind: input, shape index: {}]
  %s7 = inlined_call_operand.hbm [shape: f32[8,128], index: 7, kind: output, shape index: {}]
  %s8 = sld [smem:[#allocation0]]
  $region54: #{tpu_custom_call.1} parent=0
    _
  %s10 = ssub.s32 1, %s8
  %s11 = scalar_select 0, %s10, %s8
  $region1: #{tpu_custom_call.1} parent=0
    #allocation2 [shape = 'u8[2048]{0}', space=vmem, size = 0x800, scoped, tag = 'input window, operand 0, single buffered']
    #allocation3 [shape = 's32[1]{0}', space=sflag, size = 0x4, scoped, tag = 'scoped memory for tpu_custom_call.1']
    #allocation4 [shape = 's32[1]{0}', space=sflag, size = 0x4, scoped, tag = 'scoped memory for tpu_custom_call.1']
    #allocation5 [shape = 'u8[65536]{0}', space=vmem, size = 0x10000, scoped, tag = 'input window, operand 1, single buffered']
    #allocation6 [shape = 's32[1]{0}', space=sflag, size = 0x4, scoped, tag = 'scoped memory for tpu_custom_call.1']
    #allocation7 [shape = 'u8[131072]{0}', space=vmem, size = 0x20000, scoped, tag = 'input window, operand 3, single buffered']
    #allocation8 [shape = 'u8[65536]{0}', space=vmem, size = 0x10000, scoped, tag = 'input window, operand 5, single buffered']
    #allocation9 [shape = 's32[1]{0}', space=sflag, size = 0x4, scoped, tag = 'scoped memory for tpu_custom_call.1']
    #allocation10 [shape = 'u8[4096]{0}', space=vmem, size = 0x1000, scoped, tag = 'output window, operand 0, single buffered']
    %12 = vsyncpa [#allocation3], 0
    %13 = vsyncpa [#allocation6], 0
    %14 = vsyncpa [#allocation9], 0
    %15 = vsyncpa [#allocation4], 0
    // Predicated region
    $region2: #{tpu_custom_call.1} parent=1 // pred_check
      _
    $region3: #{tpu_custom_call.1} parent=1 // pred_check_branch
      %17 = sbr.rel (0) target = $region5
    $region4: #{tpu_custom_call.1} parent=1 // pred_region
      %s19 = ssub.s32 64, 64
      %20 = vsyncadd [#allocation3], %s19
      %s22 = sshll.u32 [#allocation2], 4
      %s23 = int_to_ptr.vmem [resolvable:$true] %s22
      %25 = dma.hbm_to_vmem [thread:$0]  %s0, 64, %s23, [#allocation3]
    $region5: #{tpu_custom_call.1} parent=1 // pred_fallthru
      _
    // Predicated region
    $region6: #{tpu_custom_call.1} parent=1 // pred_check
      _
    $region7: #{tpu_custom_call.1} parent=1 // pred_check_branch
      %27 = sbr.rel (0) target = $region9
    $region8: #{tpu_custom_call.1} parent=1 // pred_region
      %s29 = ssub.s32 2048, 2048
      %30 = vsyncadd [#allocation6], %s29
      %s31 = sshll.u32 [#allocation5], 4
      %s32 = int_to_ptr.vmem [resolvable:$true] %s31
      %37 = dma.hbm_to_vmem [thread:$0]  %s1, 2048, %s32, [#allocation6], 128, 128, 8
    $region9: #{tpu_custom_call.1} parent=1 // pred_fallthru
      _
    // Predicated region
    $region10: #{tpu_custom_call.1} parent=1 // pred_check
      _
    $region11: #{tpu_custom_call.1} parent=1 // pred_check_branch
      %39 = sbr.rel (0) target = $region13
    $region12: #{tpu_custom_call.1} parent=1 // pred_region
      _
    $region13: #{tpu_custom_call.1} parent=1 // pred_fallthru
      _
    // Predicated region
    $region14: #{tpu_custom_call.1} parent=1 // pred_check
      _
    $region15: #{tpu_custom_call.1} parent=1 // pred_check_branch
      %41 = sbr.rel (0) target = $region17
    $region16: #{tpu_custom_call.1} parent=1 // pred_region
      %s43 = ssub.s32 4096, 4096
      %44 = vsyncadd [#allocation6], %s43
      %s45 = sshll.u32 [#allocation7], 4
      %s46 = int_to_ptr.vmem [resolvable:$true] %s45
      %51 = dma.hbm_to_vmem [thread:$0]  %s3, 4096, %s46, [#allocation6], 128, 128, 8
    $region17: #{tpu_custom_call.1} parent=1 // pred_fallthru
      _
    // Predicated region
    $region18: #{tpu_custom_call.1} parent=1 // pred_check
      _
    $region19: #{tpu_custom_call.1} parent=1 // pred_check_branch
      %53 = sbr.rel (0) target = $region21
    $region20: #{tpu_custom_call.1} parent=1 // pred_region
      _
    $region21: #{tpu_custom_call.1} parent=1 // pred_fallthru
      _
    // Predicated region
    $region22: #{tpu_custom_call.1} parent=1 // pred_check
      _
    $region23: #{tpu_custom_call.1} parent=1 // pred_check_branch
      %55 = sbr.rel (0) target = $region25
    $region24: #{tpu_custom_call.1} parent=1 // pred_region
      %s57 = ssub.s32 2048, 2048
      %58 = vsyncadd [#allocation9], %s57
      %s59 = sshll.u32 [#allocation8], 4
      %s60 = int_to_ptr.vmem [resolvable:$true] %s59
      %65 = dma.hbm_to_vmem [thread:$0]  %s5, 2048, %s60, [#allocation9], 64, 64, 4
    $region25: #{tpu_custom_call.1} parent=1 // pred_fallthru
      _
    // Predicated region
    $region26: #{tpu_custom_call.1} parent=1 // pred_check
      _
    $region27: #{tpu_custom_call.1} parent=1 // pred_check_branch
      %67 = sbr.rel (0) target = $region29
    $region28: #{tpu_custom_call.1} parent=1 // pred_region
      _
    $region29: #{tpu_custom_call.1} parent=1 // pred_fallthru
      _
    // Predicated region
    $region30: #{tpu_custom_call.1} parent=1 // pred_check
      _
    $region31: #{tpu_custom_call.1} parent=1 // pred_check_branch
      %69 = sbr.rel (0) target = $region33
    $region32: #{tpu_custom_call.1} parent=1 // pred_region
      %70 = dma.done [#allocation3], 64
    $region33: #{tpu_custom_call.1} parent=1 // pred_fallthru
      _
    // Predicated region
    $region34: #{tpu_custom_call.1} parent=1 // pred_check
      _
    $region35: #{tpu_custom_call.1} parent=1 // pred_check_branch
      %72 = sbr.rel (0) target = $region37
    $region36: #{tpu_custom_call.1} parent=1 // pred_region
      %73 = dma.done [#allocation6], 2048
    $region37: #{tpu_custom_call.1} parent=1 // pred_fallthru
      _
    // Predicated region
    $region38: #{tpu_custom_call.1} parent=1 // pred_check
      _
    $region39: #{tpu_custom_call.1} parent=1 // pred_check_branch
      %75 = sbr.rel (0) target = $region41
    $region40: #{tpu_custom_call.1} parent=1 // pred_region
      %76 = dma.done [#allocation6], 4096
    $region41: #{tpu_custom_call.1} parent=1 // pred_fallthru
      _
    // Predicated region
    $region42: #{tpu_custom_call.1} parent=1 // pred_check
      _
    $region43: #{tpu_custom_call.1} parent=1 // pred_check_branch
      %78 = sbr.rel (0) target = $region45
    $region44: #{tpu_custom_call.1} parent=1 // pred_region
      %79 = dma.done [#allocation9], 2048
    $region45: #{tpu_custom_call.1} parent=1 // pred_fallthru
      _
    %v81 = vld [vmem:[#allocation2] sm:$0xf]
    %v82 = vld [vmem:[#allocation5] sm:$0xff]
    %v83 = vld [vmem:[#allocation5 + $0x8] sm:$0xff]
    %v84 = vld [vmem:[#allocation5 + $0x10] sm:$0xff]
    %v85 = vld [vmem:[#allocation5 + $0x18] sm:$0xff]
    %v86 = vld [vmem:[#allocation5 + $0x20] sm:$0xff]
    %v87 = vld [vmem:[#allocation5 + $0x28] sm:$0xff]
    %v88 = vld [vmem:[#allocation5 + $0x30] sm:$0xff]
    %v89 = vld [vmem:[#allocation5 + $0x38] sm:$0xff]
    %v90 = vld [vmem:[#allocation5 + $0x40] sm:$0xff]
    %v91 = vld [vmem:[#allocation5 + $0x48] sm:$0xff]
    %v92 = vld [vmem:[#allocation5 + $0x50] sm:$0xff]
    %v93 = vld [vmem:[#allocation5 + $0x58] sm:$0xff]
    %v94 = vld [vmem:[#allocation5 + $0x60] sm:$0xff]
    %v95 = vld [vmem:[#allocation5 + $0x68] sm:$0xff]
    %v96 = vld [vmem:[#allocation5 + $0x70] sm:$0xff]
    %v97 = vld [vmem:[#allocation5 + $0x78] sm:$0xff]
    %v98 = vld [vmem:[%s2] sm:$0x3]
    %v99 = vld [vmem:[#allocation7] sm:$0xff]
    %v100 = vld [vmem:[#allocation7 + $0x8] sm:$0xff]
    %v101 = vld [vmem:[#allocation7 + $0x10] sm:$0xff]
    %v102 = vld [vmem:[#allocation7 + $0x18] sm:$0xff]
    %v103 = vld [vmem:[#allocation7 + $0x20] sm:$0xff]
    %v104 = vld [vmem:[#allocation7 + $0x28] sm:$0xff]
    %v105 = vld [vmem:[#allocation7 + $0x30] sm:$0xff]
    %v106 = vld [vmem:[#allocation7 + $0x38] sm:$0xff]
    %v107 = vld [vmem:[#allocation7 + $0x40] sm:$0xff]
    %v108 = vld [vmem:[#allocation7 + $0x48] sm:$0xff]
    %v109 = vld [vmem:[#allocation7 + $0x50] sm:$0xff]
    %v110 = vld [vmem:[#allocation7 + $0x58] sm:$0xff]
    %v111 = vld [vmem:[#allocation7 + $0x60] sm:$0xff]
    %v112 = vld [vmem:[#allocation7 + $0x68] sm:$0xff]
    %v113 = vld [vmem:[#allocation7 + $0x70] sm:$0xff]
    %v114 = vld [vmem:[#allocation7 + $0x78] sm:$0xff]
    %v115 = vld [vmem:[#allocation7 + $0x80] sm:$0xff]
    %v116 = vld [vmem:[#allocation7 + $0x88] sm:$0xff]
    %v117 = vld [vmem:[#allocation7 + $0x90] sm:$0xff]
    %v118 = vld [vmem:[#allocation7 + $0x98] sm:$0xff]
    %v119 = vld [vmem:[#allocation7 + $0xa0] sm:$0xff]
    %v120 = vld [vmem:[#allocation7 + $0xa8] sm:$0xff]
    %v121 = vld [vmem:[#allocation7 + $0xb0] sm:$0xff]
    %v122 = vld [vmem:[#allocation7 + $0xb8] sm:$0xff]
    %v123 = vld [vmem:[#allocation7 + $0xc0] sm:$0xff]
    %v124 = vld [vmem:[#allocation7 + $0xc8] sm:$0xff]
    %v125 = vld [vmem:[#allocation7 + $0xd0] sm:$0xff]
    %v126 = vld [vmem:[#allocation7 + $0xd8] sm:$0xff]
    %v127 = vld [vmem:[#allocation7 + $0xe0] sm:$0xff]
    %v128 = vld [vmem:[#allocation7 + $0xe8] sm:$0xff]
    %v129 = vld [vmem:[#allocation7 + $0xf0] sm:$0xff]
    %v130 = vld [vmem:[#allocation7 + $0xf8] sm:$0xff]
    %v131 = vld [vmem:[%s4] sm:$0x3]
    %v132 = vld [vmem:[#allocation8] sm:$0xf]
    %v133 = vld [vmem:[#allocation8 + $0x4] sm:$0xf]
    %v134 = vld [vmem:[#allocation8 + $0x8] sm:$0xf]
    %v135 = vld [vmem:[#allocation8 + $0xc] sm:$0xf]
    %v136 = vld [vmem:[#allocation8 + $0x10] sm:$0xf]
    %v137 = vld [vmem:[#allocation8 + $0x14] sm:$0xf]
    %v138 = vld [vmem:[#allocation8 + $0x18] sm:$0xf]
    %v139 = vld [vmem:[#allocation8 + $0x1c] sm:$0xf]
    %v140 = vld [vmem:[#allocation8 + $0x20] sm:$0xf]
    %v141 = vld [vmem:[#allocation8 + $0x24] sm:$0xf]
    %v142 = vld [vmem:[#allocation8 + $0x28] sm:$0xf]
    %v143 = vld [vmem:[#allocation8 + $0x2c] sm:$0xf]
    %v144 = vld [vmem:[#allocation8 + $0x30] sm:$0xf]
    %v145 = vld [vmem:[#allocation8 + $0x34] sm:$0xf]
    %v146 = vld [vmem:[#allocation8 + $0x38] sm:$0xf]
    %v147 = vld [vmem:[#allocation8 + $0x3c] sm:$0xf]
    %v148 = vld [vmem:[#allocation8 + $0x40] sm:$0xf]
    %v149 = vld [vmem:[#allocation8 + $0x44] sm:$0xf]
    %v150 = vld [vmem:[#allocation8 + $0x48] sm:$0xf]
    %v151 = vld [vmem:[#allocation8 + $0x4c] sm:$0xf]
    %v152 = vld [vmem:[#allocation8 + $0x50] sm:$0xf]
    %v153 = vld [vmem:[#allocation8 + $0x54] sm:$0xf]
    %v154 = vld [vmem:[#allocation8 + $0x58] sm:$0xf]
    %v155 = vld [vmem:[#allocation8 + $0x5c] sm:$0xf]
    %v156 = vld [vmem:[#allocation8 + $0x60] sm:$0xf]
    %v157 = vld [vmem:[#allocation8 + $0x64] sm:$0xf]
    %v158 = vld [vmem:[#allocation8 + $0x68] sm:$0xf]
    %v159 = vld [vmem:[#allocation8 + $0x6c] sm:$0xf]
    %v160 = vld [vmem:[#allocation8 + $0x70] sm:$0xf]
    %v161 = vld [vmem:[#allocation8 + $0x74] sm:$0xf]
    %v162 = vld [vmem:[#allocation8 + $0x78] sm:$0xf]
    %v163 = vld [vmem:[#allocation8 + $0x7c] sm:$0xf]
    %v164 = vld [vmem:[%s6] sm:$0x1]
    %v166 = vlaneseq
    %v167 = vshrl.u32 %v166, 7
    %v168 = vsub.s32 0, %v167
    %v169 = vrot.slane %v98, %v168
    %v170 = vlaneseq
    %v171 = vshrl.u32 %v170, 7
    %v172 = vsub.s32 1, %v171
    %v173 = vrot.slane %v98, %v172
    %v192 = vunpack.c.l.b16 %v82
    %v193 = vunpack.c.h.b16 %v82
    %v194 = vunpack.c.l.b16 %v83
    %v195 = vunpack.c.h.b16 %v83
    %v196 = vunpack.c.l.b16 %v84
    %v197 = vunpack.c.h.b16 %v84
    %v198 = vunpack.c.l.b16 %v85
    %v199 = vunpack.c.h.b16 %v85
    %v200 = vunpack.c.l.b16 %v86
    %v201 = vunpack.c.h.b16 %v86
    %v202 = vunpack.c.l.b16 %v87
    %v203 = vunpack.c.h.b16 %v87
    %v204 = vunpack.c.l.b16 %v88
    %v205 = vunpack.c.h.b16 %v88
    %v206 = vunpack.c.l.b16 %v89
    %v207 = vunpack.c.h.b16 %v89
    %v208 = vunpack.c.l.b16 %v90
    %v209 = vunpack.c.h.b16 %v90
    %v210 = vunpack.c.l.b16 %v91
    %v211 = vunpack.c.h.b16 %v91
    %v212 = vunpack.c.l.b16 %v92
    %v213 = vunpack.c.h.b16 %v92
    %v214 = vunpack.c.l.b16 %v93
    %v215 = vunpack.c.h.b16 %v93
    %v216 = vunpack.c.l.b16 %v94
    %v217 = vunpack.c.h.b16 %v94
    %v218 = vunpack.c.l.b16 %v95
    %v219 = vunpack.c.h.b16 %v95
    %v220 = vunpack.c.l.b16 %v96
    %v221 = vunpack.c.h.b16 %v96
    %v222 = vunpack.c.l.b16 %v97
    %v223 = vunpack.c.h.b16 %v97
    %v224 = vpack.c.b16 %v194, %v192
    %v225 = vpack.c.b16 %v195, %v193
    %v226 = vpack.c.b16 %v198, %v196
    %v227 = vpack.c.b16 %v199, %v197
    %v228 = vpack.c.b16 %v202, %v200
    %v229 = vpack.c.b16 %v203, %v201
    %v230 = vpack.c.b16 %v206, %v204
    %v231 = vpack.c.b16 %v207, %v205
    %v232 = vpack.c.b16 %v210, %v208
    %v233 = vpack.c.b16 %v211, %v209
    %v234 = vpack.c.b16 %v214, %v212
    %v235 = vpack.c.b16 %v215, %v213
    %v236 = vpack.c.b16 %v218, %v216
    %v237 = vpack.c.b16 %v219, %v217
    %v238 = vpack.c.b16 %v222, %v220
    %v239 = vpack.c.b16 %v223, %v221
    %256 = vmatprep.subr.bf16.mxu0 %v239
    %257 = vmatpush1.bf16.msra.mxu0 %v238
    %258 = vmatprep.subr.bf16.mxu0 %v237
    %259 = vmatpush1.bf16.msra.mxu0 %v236
    %260 = vmatprep.subr.bf16.mxu0 %v235
    %261 = vmatpush1.bf16.msra.mxu0 %v234
    %262 = vmatprep.subr.bf16.mxu0 %v233
    %263 = vmatpush1.bf16.msra.mxu0 %v232
    %264 = vmatprep.subr.bf16.mxu0 %v231
    %265 = vmatpush1.bf16.msra.mxu0 %v230
    %266 = vmatprep.subr.bf16.mxu0 %v229
    %267 = vmatpush1.bf16.msra.mxu0 %v228
    %268 = vmatprep.subr.bf16.mxu0 %v227
    %269 = vmatpush1.bf16.msra.mxu0 %v226
    %270 = vmatprep.subr.bf16.mxu0 %v225
    %271 = vmatpush1.bf16.msra.mxu0 %v224
    %272 = vmatprep.subr.bf16.mxu0 0
    %273 = vmatpush2.bf16.msra.mxu0 0
    %274 = vmatprep.subr.bf16.mxu0 0
    %275 = vmatpush2.bf16.msra.mxu0 0
    %276 = vmatprep.subr.bf16.mxu0 0
    %277 = vmatpush2.bf16.msra.mxu0 0
    %278 = vmatprep.subr.bf16.mxu0 0
    %279 = vmatpush2.bf16.msra.mxu0 0
    %280 = vmatprep.subr.bf16.mxu0 0
    %281 = vmatpush2.bf16.msra.mxu0 0
    %282 = vmatprep.subr.bf16.mxu0 0
    %283 = vmatpush2.bf16.msra.mxu0 0
    %284 = vmatprep.subr.bf16.mxu0 0
    %285 = vmatpush2.bf16.msra.mxu0 0
    %286 = vmatprep.subr.bf16.mxu0 0
    %287 = vmatpush2.bf16.msra.mxu0 0
    %288 = vmatprep.mubr.bf16.mxu0 0
    %289 = vmatmul.mubr.bf16.gmra.mxu0 %v81
    %v290 = vpop.f32.mrf.mxu0
    %v291 = vadd.f32 %v169, %v290
    %v292 = vpop.f32.mrf.mxu0
    %v293 = vadd.f32 %v173, %v292
    %v294 = vpop.f32.mrf.mxu0
    %v295 = vpop.f32.mrf.mxu0
    %296 = vdwg.mxu0
    %vm297 = vcmp.gt.f32.partialorder %v291, 0.0
    %vm298 = vcmp.gt.f32.partialorder %v293, 0.0
    %v299 = vmul.f32 %v291, 0.2
    %v300 = vmul.f32 %v293, 0.2
    %v301 = vsel %vm297, %v291, %v299
    %v302 = vsel %vm298, %v293, %v300
    %v303 = vpack.c.bf16 %v301, %v301
    %v304 = vpack.c.bf16 %v302, %v302
    %v306 = vlaneseq
    %v307 = vshrl.u32 %v306, 7
    %v308 = vsub.s32 0, %v307
    %v309 = vrot.slane %v131, %v308
    %v310 = vlaneseq
    %v311 = vshrl.u32 %v310, 7
    %v312 = vsub.s32 1, %v311
    %v313 = vrot.slane %v131, %v312
    %v348 = vunpack.c.l.b16 %v99
    %v349 = vunpack.c.h.b16 %v99
    %v350 = vunpack.c.l.b16 %v100
    %v351 = vunpack.c.h.b16 %v100
    %v352 = vunpack.c.l.b16 %v101
    %v353 = vunpack.c.h.b16 %v101
    %v354 = vunpack.c.l.b16 %v102
    %v355 = vunpack.c.h.b16 %v102
    %v356 = vunpack.c.l.b16 %v103
    %v357 = vunpack.c.h.b16 %v103
    %v358 = vunpack.c.l.b16 %v104
    %v359 = vunpack.c.h.b16 %v104
    %v360 = vunpack.c.l.b16 %v105
    %v361 = vunpack.c.h.b16 %v105
    %v362 = vunpack.c.l.b16 %v106
    %v363 = vunpack.c.h.b16 %v106
    %v364 = vunpack.c.l.b16 %v107
    %v365 = vunpack.c.h.b16 %v107
    %v366 = vunpack.c.l.b16 %v108
    %v367 = vunpack.c.h.b16 %v108
    %v368 = vunpack.c.l.b16 %v109
    %v369 = vunpack.c.h.b16 %v109
    %v370 = vunpack.c.l.b16 %v110
    %v371 = vunpack.c.h.b16 %v110
    %v372 = vunpack.c.l.b16 %v111
    %v373 = vunpack.c.h.b16 %v111
    %v374 = vunpack.c.l.b16 %v112
    %v375 = vunpack.c.h.b16 %v112
    %v376 = vunpack.c.l.b16 %v113
    %v377 = vunpack.c.h.b16 %v113
    %v378 = vunpack.c.l.b16 %v114
    %v379 = vunpack.c.h.b16 %v114
    %v380 = vunpack.c.l.b16 %v115
    %v381 = vunpack.c.h.b16 %v115
    %v382 = vunpack.c.l.b16 %v116
    %v383 = vunpack.c.h.b16 %v116
    %v384 = vunpack.c.l.b16 %v117
    %v385 = vunpack.c.h.b16 %v117
    %v386 = vunpack.c.l.b16 %v118
    %v387 = vunpack.c.h.b16 %v118
    %v388 = vunpack.c.l.b16 %v119
    %v389 = vunpack.c.h.b16 %v119
    %v390 = vunpack.c.l.b16 %v120
    %v391 = vunpack.c.h.b16 %v120
    %v392 = vunpack.c.l.b16 %v121
    %v393 = vunpack.c.h.b16 %v121
    %v394 = vunpack.c.l.b16 %v122
    %v395 = vunpack.c.h.b16 %v122
    %v396 = vunpack.c.l.b16 %v123
    %v397 = vunpack.c.h.b16 %v123
    %v398 = vunpack.c.l.b16 %v124
    %v399 = vunpack.c.h.b16 %v124
    %v400 = vunpack.c.l.b16 %v125
    %v401 = vunpack.c.h.b16 %v125
    %v402 = vunpack.c.l.b16 %v126
    %v403 = vunpack.c.h.b16 %v126
    %v404 = vunpack.c.l.b16 %v127
    %v405 = vunpack.c.h.b16 %v127
    %v406 = vunpack.c.l.b16 %v128
    %v407 = vunpack.c.h.b16 %v128
    %v408 = vunpack.c.l.b16 %v129
    %v409 = vunpack.c.h.b16 %v129
    %v410 = vunpack.c.l.b16 %v130
    %v411 = vunpack.c.h.b16 %v130
    %v412 = vpack.c.b16 %v350, %v348
    %v413 = vpack.c.b16 %v351, %v349
    %v414 = vpack.c.b16 %v354, %v352
    %v415 = vpack.c.b16 %v355, %v353
    %v416 = vpack.c.b16 %v358, %v356
    %v417 = vpack.c.b16 %v359, %v357
    %v418 = vpack.c.b16 %v362, %v360
    %v419 = vpack.c.b16 %v363, %v361
    %v420 = vpack.c.b16 %v366, %v364
    %v421 = vpack.c.b16 %v367, %v365
    %v422 = vpack.c.b16 %v370, %v368
    %v423 = vpack.c.b16 %v371, %v369
    %v424 = vpack.c.b16 %v374, %v372
    %v425 = vpack.c.b16 %v375, %v373
    %v426 = vpack.c.b16 %v378, %v376
    %v427 = vpack.c.b16 %v379, %v377
    %v428 = vpack.c.b16 %v382, %v380
    %v429 = vpack.c.b16 %v383, %v381
    %v430 = vpack.c.b16 %v386, %v384
    %v431 = vpack.c.b16 %v387, %v385
    %v432 = vpack.c.b16 %v390, %v388
    %v433 = vpack.c.b16 %v391, %v389
    %v434 = vpack.c.b16 %v394, %v392
    %v435 = vpack.c.b16 %v395, %v393
    %v436 = vpack.c.b16 %v398, %v396
    %v437 = vpack.c.b16 %v399, %v397
    %v438 = vpack.c.b16 %v402, %v400
    %v439 = vpack.c.b16 %v403, %v401
    %v440 = vpack.c.b16 %v406, %v404
    %v441 = vpack.c.b16 %v407, %v405
    %v442 = vpack.c.b16 %v410, %v408
    %v443 = vpack.c.b16 %v411, %v409
    %476 = vmatprep.subr.bf16.mxu0 %v427
    %477 = vmatpush1.bf16.msra.mxu0 %v426
    %478 = vmatprep.subr.bf16.mxu0 %v425
    %479 = vmatpush1.bf16.msra.mxu0 %v424
    %480 = vmatprep.subr.bf16.mxu0 %v423
    %481 = vmatpush1.bf16.msra.mxu0 %v422
    %482 = vmatprep.subr.bf16.mxu0 %v421
    %483 = vmatpush1.bf16.msra.mxu0 %v420
    %484 = vmatprep.subr.bf16.mxu0 %v419
    %485 = vmatpush1.bf16.msra.mxu0 %v418
    %486 = vmatprep.subr.bf16.mxu0 %v417
    %487 = vmatpush1.bf16.msra.mxu0 %v416
    %488 = vmatprep.subr.bf16.mxu0 %v415
    %489 = vmatpush1.bf16.msra.mxu0 %v414
    %490 = vmatprep.subr.bf16.mxu0 %v413
    %491 = vmatpush1.bf16.msra.mxu0 %v412
    %492 = vmatprep.subr.bf16.mxu0 %v443
    %493 = vmatpush2.bf16.msra.mxu0 %v442
    %494 = vmatprep.subr.bf16.mxu0 %v441
    %495 = vmatpush2.bf16.msra.mxu0 %v440
    %496 = vmatprep.subr.bf16.mxu0 %v439
    %497 = vmatpush2.bf16.msra.mxu0 %v438
    %498 = vmatprep.subr.bf16.mxu0 %v437
    %499 = vmatpush2.bf16.msra.mxu0 %v436
    %500 = vmatprep.subr.bf16.mxu0 %v435
    %501 = vmatpush2.bf16.msra.mxu0 %v434
    %502 = vmatprep.subr.bf16.mxu0 %v433
    %503 = vmatpush2.bf16.msra.mxu0 %v432
    %504 = vmatprep.subr.bf16.mxu0 %v431
    %505 = vmatpush2.bf16.msra.mxu0 %v430
    %506 = vmatprep.subr.bf16.mxu0 %v429
    %507 = vmatpush2.bf16.msra.mxu0 %v428
    %508 = vmatprep.mubr.bf16.mxu0 %v304
    %509 = vmatmul.mubr.bf16.gmra.mxu0 %v303
    %v510 = vpop.f32.mrf.mxu0
    %v511 = vadd.f32 %v309, %v510
    %v512 = vpop.f32.mrf.mxu0
    %v513 = vadd.f32 %v313, %v512
    %v514 = vpop.f32.mrf.mxu0
    %v515 = vpop.f32.mrf.mxu0
    %516 = vdwg.mxu0
    %vm517 = vcmp.gt.f32.partialorder %v511, 0.0
    %vm518 = vcmp.gt.f32.partialorder %v513, 0.0
    %v519 = vmul.f32 %v511, 0.2
    %v520 = vmul.f32 %v513, 0.2
    %v521 = vsel %vm517, %v511, %v519
    %v522 = vsel %vm518, %v513, %v520
    %v523 = vpack.c.bf16 %v521, %v521
    %v524 = vpack.c.bf16 %v522, %v522
    %v526 = vlaneseq
    %v527 = vshrl.u32 %v526, 7
    %v528 = vsub.s32 0, %v527
    %v529 = vrot.slane %v164, %v528
    %v563 = vunpack.c.l.b16 %v132
    %v564 = vunpack.c.l.b16 %v133
    %v565 = vunpack.c.l.b16 %v134
    %v566 = vunpack.c.l.b16 %v135
    %v567 = vunpack.c.l.b16 %v136
    %v568 = vunpack.c.l.b16 %v137
    %v569 = vunpack.c.l.b16 %v138
    %v570 = vunpack.c.l.b16 %v139
    %v571 = vunpack.c.l.b16 %v140
    %v572 = vunpack.c.l.b16 %v141
    %v573 = vunpack.c.l.b16 %v142
    %v574 = vunpack.c.l.b16 %v143
    %v575 = vunpack.c.l.b16 %v144
    %v576 = vunpack.c.l.b16 %v145
    %v577 = vunpack.c.l.b16 %v146
    %v578 = vunpack.c.l.b16 %v147
    %v579 = vunpack.c.l.b16 %v148
    %v580 = vunpack.c.l.b16 %v149
    %v581 = vunpack.c.l.b16 %v150
    %v582 = vunpack.c.l.b16 %v151
    %v583 = vunpack.c.l.b16 %v152
    %v584 = vunpack.c.l.b16 %v153
    %v585 = vunpack.c.l.b16 %v154
    %v586 = vunpack.c.l.b16 %v155
    %v587 = vunpack.c.l.b16 %v156
    %v588 = vunpack.c.l.b16 %v157
    %v589 = vunpack.c.l.b16 %v158
    %v590 = vunpack.c.l.b16 %v159
    %v591 = vunpack.c.l.b16 %v160
    %v592 = vunpack.c.l.b16 %v161
    %v593 = vunpack.c.l.b16 %v162
    %v594 = vunpack.c.l.b16 %v163
    %v595 = vpack.c.b16 %v564, %v563
    %v596 = vpack.c.b16 %v566, %v565
    %v597 = vpack.c.b16 %v568, %v567
    %v598 = vpack.c.b16 %v570, %v569
    %v599 = vpack.c.b16 %v572, %v571
    %v600 = vpack.c.b16 %v574, %v573
    %v601 = vpack.c.b16 %v576, %v575
    %v602 = vpack.c.b16 %v578, %v577
    %v603 = vpack.c.b16 %v580, %v579
    %v604 = vpack.c.b16 %v582, %v581
    %v605 = vpack.c.b16 %v584, %v583
    %v606 = vpack.c.b16 %v586, %v585
    %v607 = vpack.c.b16 %v588, %v587
    %v608 = vpack.c.b16 %v590, %v589
    %v609 = vpack.c.b16 %v592, %v591
    %v610 = vpack.c.b16 %v594, %v593
    %627 = vmatprep.subr.bf16.mxu0 0
    %628 = vmatpush1.bf16.msra.mxu0 %v602
    %629 = vmatprep.subr.bf16.mxu0 0
    %630 = vmatpush1.bf16.msra.mxu0 %v601
    %631 = vmatprep.subr.bf16.mxu0 0
    %632 = vmatpush1.bf16.msra.mxu0 %v600
    %633 = vmatprep.subr.bf16.mxu0 0
    %634 = vmatpush1.bf16.msra.mxu0 %v599
    %635 = vmatprep.subr.bf16.mxu0 0
    %636 = vmatpush1.bf16.msra.mxu0 %v598
    %637 = vmatprep.subr.bf16.mxu0 0
    %638 = vmatpush1.bf16.msra.mxu0 %v597
    %639 = vmatprep.subr.bf16.mxu0 0
    %640 = vmatpush1.bf16.msra.mxu0 %v596
    %641 = vmatprep.subr.bf16.mxu0 0
    %642 = vmatpush1.bf16.msra.mxu0 %v595
    %643 = vmatprep.subr.bf16.mxu0 0
    %644 = vmatpush2.bf16.msra.mxu0 %v610
    %645 = vmatprep.subr.bf16.mxu0 0
    %646 = vmatpush2.bf16.msra.mxu0 %v609
    %647 = vmatprep.subr.bf16.mxu0 0
    %648 = vmatpush2.bf16.msra.mxu0 %v608
    %649 = vmatprep.subr.bf16.mxu0 0
    %650 = vmatpush2.bf16.msra.mxu0 %v607
    %651 = vmatprep.subr.bf16.mxu0 0
    %652 = vmatpush2.bf16.msra.mxu0 %v606
    %653 = vmatprep.subr.bf16.mxu0 0
    %654 = vmatpush2.bf16.msra.mxu0 %v605
    %655 = vmatprep.subr.bf16.mxu0 0
    %656 = vmatpush2.bf16.msra.mxu0 %v604
    %657 = vmatprep.subr.bf16.mxu0 0
    %658 = vmatpush2.bf16.msra.mxu0 %v603
    %659 = vmatprep.mubr.bf16.mxu0 %v524
    %660 = vmatmul.mubr.bf16.gmra.mxu0 %v523
    %v661 = vpop.f32.mrf.mxu0
    %v662 = vadd.f32 %v529, %v661
    %v663 = vpop.f32.mrf.mxu0
    %v664 = vpop.f32.mrf.mxu0
    %v665 = vpop.f32.mrf.mxu0
    %666 = vdwg.mxu0
    %vm667 = vcmp.gt.f32.partialorder %v662, 0.0
    %v668 = vmul.f32 %v662, 0.01
    %v669 = vsel %vm667, %v662, %v668
    %670 = vst [vmem:[#allocation10] sm:$0xff] %v669
    // Predicated region
    $region46: #{tpu_custom_call.1} parent=1 // pred_check
      _
    $region47: #{tpu_custom_call.1} parent=1 // pred_check_branch
      %672 = sbr.rel (0) target = $region49
    $region48: #{tpu_custom_call.1} parent=1 // pred_region
      %s674 = ssub.s32 128, 128
      %675 = vsyncadd [#allocation4], %s674
      %s677 = sshll.u32 [#allocation10], 4
      %s678 = int_to_ptr.vmem [resolvable:$true] %s677
      %680 = dma.vmem_to_hbm [thread:$0]  %s678, 128, %s7, [#allocation4]
    $region49: #{tpu_custom_call.1} parent=1 // pred_fallthru
      _
    // Predicated region
    $region50: #{tpu_custom_call.1} parent=1 // pred_check
      _
    $region51: #{tpu_custom_call.1} parent=1 // pred_check_branch
      %682 = sbr.rel (0) target = $region53
    $region52: #{tpu_custom_call.1} parent=1 // pred_region
      %683 = dma.done [#allocation4], 128
    $region53: #{tpu_custom_call.1} parent=1 // pred_fallthru
      _
    %684 = vsyncpa [#allocation3], 1
    %685 = vsyncpa [#allocation6], 1
    %686 = vsyncpa [#allocation9], 1
    %687 = vsyncpa [#allocation4], 1

</llo_original>
